<compile_context>
chip_gen: v5e
topology: v5e:2x2
jax: 0.10.0
libtpu: 0.0.40
codegen_flags: <defaults>
</compile_context>

<pallas_src>
import functools

import jax
import jax.numpy as jnp
from jax import lax
from jax.experimental import pallas as pl
from jax.experimental.pallas import tpu as pltpu


def focal_loss_kernel(alpha_ref, logits_ref, targets_ref, out_ref, *,
                      gamma, n_valid, padded_total):
    c, tile_rows, _ = logits_ref.shape            # (C, TILE_ROWS, 128)
    tgt = targets_ref[...]                        # (TILE_ROWS, 128) int32

    # Class-axis max, unrolled over the tiny C axis; per-row cast keeps live
    # f32 state minimal (VMEM loads are cheap, casts ride the VPU slack).
    m = logits_ref[0].astype(jnp.float32)
    for k in range(1, c):
        m = jnp.maximum(m, logits_ref[k].astype(jnp.float32))

    # Sum-exp + gather of logits[target], exp(logit[target]-m) and
    # alpha[target] via bool mask + select (no one-hot multiply, no XLU).
    # TODO(synk): out-of-range targets silently contribute 0 instead of
    # raising like torch CrossEntropyLoss.
    s = jnp.zeros_like(m)
    logit_t = jnp.zeros_like(m)
    exp_t = jnp.zeros_like(m)
    alpha_t = jnp.zeros_like(m)
    for k in range(c):
        row = logits_ref[k].astype(jnp.float32)
        e = jnp.exp(row - m)
        s = s + e
        hit = tgt == k
        logit_t = jnp.where(hit, row, logit_t)
        exp_t = jnp.where(hit, e, exp_t)
        alpha_t = jnp.where(hit, alpha_ref[k], alpha_t)   # alpha[k] is SMEM scalar

    # ce = logsumexp - logit_t ; pt = exp(-ce) = exp_t / s  (reuses the exps
    # above -> one fewer EUP transcendental per sample than exp(-ce)).
    ce = jnp.log(s) + (m - logit_t)
    inv_s = pl.reciprocal(s, approx=True)
    inv_s = inv_s * (2.0 - s * inv_s)             # one Newton step (VPU) -> ~f32 accuracy
    pt = jnp.clip(exp_t * inv_s, 1e-8, 1.0 - 1e-8)
    one_m_pt = 1.0 - pt

    # Integer-gamma fast path: exponentiation by squaring (VPU) instead of pow.
    g = float(gamma)
    if g.is_integer() and 0 <= int(g) <= 32:
        e_int = int(g)
        if e_int == 0:
            w = jnp.ones_like(one_m_pt)
        else:
            w = None
            base = one_m_pt
            while e_int:
                if e_int & 1:
                    w = base if w is None else w * base
                e_int >>= 1
                if e_int:
                    base = base * base
    else:
        w = one_m_pt ** jnp.float32(g)

    focal = alpha_t * w * ce                      # (TILE_ROWS, 128)

    # Lane-dense (1, 128) per-tile partial (sum over the sublane/row axis).
    # Only the last grid tile can contain padded columns (wrapper pad to 128)
    # or garbage edge rows (Pallas edge block), so only it pays the mask.
    if n_valid == padded_total:
        out_ref[...] = jnp.sum(focal, axis=0, keepdims=True)
    else:
        pid = pl.program_id(0)
        last = pl.num_programs(0) - 1

        @pl.when(pid != last)
        def _():
            out_ref[...] = jnp.sum(focal, axis=0, keepdims=True)

        @pl.when(pid == last)
        def _():
            row_i = lax.broadcasted_iota(jnp.int32, (tile_rows, 128), 0)
            lane_i = lax.broadcasted_iota(jnp.int32, (tile_rows, 128), 1)
            pos = (pid * tile_rows + row_i) * 128 + lane_i
            out_ref[...] = jnp.sum(jnp.where(pos < n_valid, focal, 0.0),
                                   axis=0, keepdims=True)


def _choose_tile_rows(rows_total):
    """Rows (of 128 samples) per grid tile.

    <= 64 rows keeps the per-buffer logits block at C*64*128*4 B = 128 KiB for
    C=4 f32 (a few-hundred-KiB total working set, safe for v5e's 16 MiB scoped
    default and v7x's smaller VMEM). When there is enough work we split into
    at least two tiles so v7x's two TensorCores both run.
    """
    cap = 64
    if rows_total <= 8:
        return rows_total
    half = ((rows_total + 1) // 2 + 7) // 8 * 8   # multiple of 8 (layout rule)
    return max(8, min(cap, half))


def focal_loss(logits, targets, alpha, gamma=2.0, *, tile_rows=None):
    """Pallas TPU focal loss.

    logits: (N, C) float (kept native dtype - bf16 halves HBM traffic),
    targets: (N,) int, alpha: (C,) float.  Returns a scalar f32 loss.
    """
    n, c = logits.shape

    # Layout plumbing: batch packed across (sublane, lane) = (rows, 128).
    logits_t = jnp.transpose(logits)              # (C, N), native dtype
    targets_i = targets.astype(jnp.int32)
    n_pad = ((n + 127) // 128) * 128              # only pad up to next 128
    if n_pad != n:
        logits_t = jnp.pad(logits_t, ((0, 0), (0, n_pad - n)))
        targets_i = jnp.pad(targets_i, (0, n_pad - n))
    rows_total = n_pad // 128
    logits_r = logits_t.reshape(c, rows_total, 128)   # free row-major reshape
    targets_r = targets_i.reshape(rows_total, 128)
    alpha_f32 = alpha.astype(jnp.float32).reshape(c)

    if tile_rows is None:
        tile_rows = _choose_tile_rows(rows_total)
    num_tiles = (rows_total + tile_rows - 1) // tile_rows

    kernel = functools.partial(
        focal_loss_kernel,
        gamma=float(gamma),
        n_valid=n,
        padded_total=num_tiles * tile_rows * 128,
    )

    partials = pl.pallas_call(
        kernel,
        out_shape=jax.ShapeDtypeStruct((1, num_tiles * 128), jnp.float32),
        grid=(num_tiles,),
        in_specs=[
            # Tiny class-weight table -> SMEM (scalar-indexed reads in-kernel).
            pl.BlockSpec(memory_space=pltpu.MemorySpace.SMEM),
            # Logits (C, TILE_ROWS, 128): batch dense on (sublane, lane).
            # (If DMA ever becomes exposed, bump to pipeline_mode=pl.Buffered(3).)
            pl.BlockSpec((c, tile_rows, 128), lambda i: (0, i, 0)),
            # Targets (TILE_ROWS, 128).
            pl.BlockSpec((tile_rows, 128), lambda i: (i, 0)),
        ],
        # Each grid step owns a distinct lane-dense (1, 128) partial-sum block.
        out_specs=pl.BlockSpec((1, 128), lambda i: (0, i)),
        compiler_params=pltpu.CompilerParams(
            dimension_semantics=("parallel",)),   # lets v7x split tiles across 2 TCs
    )(alpha_f32, logits_r, targets_r)

    return jnp.sum(partials) / jnp.float32(n)


def focal_loss_ref(logits, targets, alpha, gamma=2.0):
    """Pure-JAX reference for correctness checking."""
    logits = logits.astype(jnp.float32)
    logp = jax.nn.log_softmax(logits, axis=-1)
    ce = -jnp.take_along_axis(logp, targets[:, None].astype(jnp.int32), axis=-1)[:, 0]
    pt = jnp.clip(jnp.exp(-ce), 1e-8, 1.0 - 1e-8)
    focal = alpha[targets] * (1.0 - pt) ** gamma * ce
    return jnp.mean(focal)


if __name__ == "__main__":
    key = jax.random.PRNGKey(0)
    k1, k2, k3, k4, k5, k6 = jax.random.split(key, 6)

    # Small shapes consistent with the module: batch=8, num_classes=4 emotions.
    N, C = 8, 4
    logits = jax.random.normal(k1, (N, C), dtype=jnp.float32) * 2.0
    targets = jax.random.randint(k2, (N,), 0, C, dtype=jnp.int32)
    alpha = jnp.linspace(0.25, 1.0, C, dtype=jnp.float32)
    gamma = 2.0

    loss = jax.block_until_ready(focal_loss(logits, targets, alpha, gamma))
    loss_ref = focal_loss_ref(logits, targets, alpha, gamma)
    assert jnp.allclose(loss, loss_ref, rtol=1e-4, atol=1e-5), (loss, loss_ref)

    # Multi-tile grid + padded last columns (ragged batch) path.
    N2 = 2000
    logits2 = jax.random.normal(k3, (N2, C), dtype=jnp.float32) * 2.0
    targets2 = jax.random.randint(k4, (N2,), 0, C, dtype=jnp.int32)
    loss2 = jax.block_until_ready(focal_loss(logits2, targets2, alpha, gamma))
    loss2_ref = focal_loss_ref(logits2, targets2, alpha, gamma)
    assert jnp.allclose(loss2, loss2_ref, rtol=1e-4, atol=1e-5), (loss2, loss2_ref)

    # Ragged row count (Pallas edge block in the row dim) + explicit tile size.
    N3 = 1200
    logits3 = jax.random.normal(k5, (N3, C), dtype=jnp.float32) * 2.0
    targets3 = jax.random.randint(k6, (N3,), 0, C, dtype=jnp.int32)
    loss3 = jax.block_until_ready(
        focal_loss(logits3, targets3, alpha, gamma, tile_rows=8))
    loss3_ref = focal_loss_ref(logits3, targets3, alpha, gamma)
    assert jnp.allclose(loss3, loss3_ref, rtol=1e-4, atol=1e-5), (loss3, loss3_ref)

    print("KERNEL_OK")
</pallas_src>

<mosaic_0001>
module attributes {stable_mosaic.version = 11 : i64} {
  func.func @focal_loss_kernel(%arg0: i32, %arg1: memref<4xf32, #tpu.memory_space<smem>>, %arg2: memref<4x1x128xf32, #tpu.memory_space<vmem>>, %arg3: memref<1x128xi32, #tpu.memory_space<vmem>>, %arg4: memref<1x128xf32, #tpu.memory_space<vmem>>) attributes {dimension_semantics = [#tpu.dimension_semantics<parallel>], iteration_bounds = array<i64: 1>, scalar_prefetch = 0 : i64, scratch_operands = 0 : i64, tpu.core_type = #tpu.core_type<tc>, window_params = [{transform_indices = @transform_0, window_bounds = array<i64: 4>}, {transform_indices = @transform_1, window_bounds = array<i64: 4, 1, 128>}, {transform_indices = @transform_2, window_bounds = array<i64: 1, 128>}, {transform_indices = @transform_3, window_bounds = array<i64: 1, 128>}]} {
    %c0 = arith.constant 0 : index
    %c0_0 = arith.constant 0 : index
    %0 = vector.load %arg3[%c0, %c0_0] : memref<1x128xi32, #tpu.memory_space<vmem>>, vector<1x128xi32>
    %c0_1 = arith.constant 0 : index
    %c0_2 = arith.constant 0 : index
    %c0_3 = arith.constant 0 : index
    %1 = vector.load %arg2[%c0_1, %c0_2, %c0_3] : memref<4x1x128xf32, #tpu.memory_space<vmem>>, vector<1x1x128xf32>
    %2 = vector.shape_cast %1 : vector<1x1x128xf32> to vector<1x128xf32>
    %c1 = arith.constant 1 : index
    %c0_4 = arith.constant 0 : index
    %c0_5 = arith.constant 0 : index
    %3 = vector.load %arg2[%c1, %c0_4, %c0_5] : memref<4x1x128xf32, #tpu.memory_space<vmem>>, vector<1x1x128xf32>
    %4 = vector.shape_cast %3 : vector<1x1x128xf32> to vector<1x128xf32>
    %5 = arith.maximumf %2, %4 : vector<1x128xf32>
    %c2 = arith.constant 2 : index
    %c0_6 = arith.constant 0 : index
    %c0_7 = arith.constant 0 : index
    %6 = vector.load %arg2[%c2, %c0_6, %c0_7] : memref<4x1x128xf32, #tpu.memory_space<vmem>>, vector<1x1x128xf32>
    %7 = vector.shape_cast %6 : vector<1x1x128xf32> to vector<1x128xf32>
    %8 = arith.maximumf %5, %7 : vector<1x128xf32>
    %c3 = arith.constant 3 : index
    %c0_8 = arith.constant 0 : index
    %c0_9 = arith.constant 0 : index
    %9 = vector.load %arg2[%c3, %c0_8, %c0_9] : memref<4x1x128xf32, #tpu.memory_space<vmem>>, vector<1x1x128xf32>
    %10 = vector.shape_cast %9 : vector<1x1x128xf32> to vector<1x128xf32>
    %11 = arith.maximumf %8, %10 : vector<1x128xf32>
    %cst = arith.constant 0.000000e+00 : f32
    %12 = vector.broadcast %cst : f32 to vector<1x128xf32>
    %cst_10 = arith.constant 0.000000e+00 : f32
    %13 = vector.broadcast %cst_10 : f32 to vector<1x128xf32>
    %cst_11 = arith.constant 0.000000e+00 : f32
    %14 = vector.broadcast %cst_11 : f32 to vector<1x128xf32>
    %cst_12 = arith.constant 0.000000e+00 : f32
    %15 = vector.broadcast %cst_12 : f32 to vector<1x128xf32>
    %c0_13 = arith.constant 0 : index
    %c0_14 = arith.constant 0 : index
    %c0_15 = arith.constant 0 : index
    %16 = vector.load %arg2[%c0_13, %c0_14, %c0_15] : memref<4x1x128xf32, #tpu.memory_space<vmem>>, vector<1x1x128xf32>
    %17 = vector.shape_cast %16 : vector<1x1x128xf32> to vector<1x128xf32>
    %18 = arith.subf %17, %11 : vector<1x128xf32>
    %19 = math.exp %18 : vector<1x128xf32>
    %20 = arith.addf %12, %19 : vector<1x128xf32>
    %c0_i32 = arith.constant 0 : i32
    %21 = vector.broadcast %c0_i32 : i32 to vector<1x128xi32>
    %22 = arith.cmpi eq, %0, %21 : vector<1x128xi32>
    %23 = arith.select %22, %17, %13 : vector<1x128xi1>, vector<1x128xf32>
    %24 = arith.select %22, %19, %14 : vector<1x128xi1>, vector<1x128xf32>
    %c0_16 = arith.constant 0 : index
    %25 = memref.load %arg1[%c0_16] : memref<4xf32, #tpu.memory_space<smem>>
    %26 = vector.broadcast %25 : f32 to vector<1x128xf32>
    %27 = arith.select %22, %26, %15 : vector<1x128xi1>, vector<1x128xf32>
    %c1_17 = arith.constant 1 : index
    %c0_18 = arith.constant 0 : index
    %c0_19 = arith.constant 0 : index
    %28 = vector.load %arg2[%c1_17, %c0_18, %c0_19] : memref<4x1x128xf32, #tpu.memory_space<vmem>>, vector<1x1x128xf32>
    %29 = vector.shape_cast %28 : vector<1x1x128xf32> to vector<1x128xf32>
    %30 = arith.subf %29, %11 : vector<1x128xf32>
    %31 = math.exp %30 : vector<1x128xf32>
    %32 = arith.addf %20, %31 : vector<1x128xf32>
    %c1_i32 = arith.constant 1 : i32
    %33 = vector.broadcast %c1_i32 : i32 to vector<1x128xi32>
    %34 = arith.cmpi eq, %0, %33 : vector<1x128xi32>
    %35 = arith.select %34, %29, %23 : vector<1x128xi1>, vector<1x128xf32>
    %36 = arith.select %34, %31, %24 : vector<1x128xi1>, vector<1x128xf32>
    %c1_20 = arith.constant 1 : index
    %37 = memref.load %arg1[%c1_20] : memref<4xf32, #tpu.memory_space<smem>>
    %38 = vector.broadcast %37 : f32 to vector<1x128xf32>
    %39 = arith.select %34, %38, %27 : vector<1x128xi1>, vector<1x128xf32>
    %c2_21 = arith.constant 2 : index
    %c0_22 = arith.constant 0 : index
    %c0_23 = arith.constant 0 : index
    %40 = vector.load %arg2[%c2_21, %c0_22, %c0_23] : memref<4x1x128xf32, #tpu.memory_space<vmem>>, vector<1x1x128xf32>
    %41 = vector.shape_cast %40 : vector<1x1x128xf32> to vector<1x128xf32>
    %42 = arith.subf %41, %11 : vector<1x128xf32>
    %43 = math.exp %42 : vector<1x128xf32>
    %44 = arith.addf %32, %43 : vector<1x128xf32>
    %c2_i32 = arith.constant 2 : i32
    %45 = vector.broadcast %c2_i32 : i32 to vector<1x128xi32>
    %46 = arith.cmpi eq, %0, %45 : vector<1x128xi32>
    %47 = arith.select %46, %41, %35 : vector<1x128xi1>, vector<1x128xf32>
    %48 = arith.select %46, %43, %36 : vector<1x128xi1>, vector<1x128xf32>
    %c2_24 = arith.constant 2 : index
    %49 = memref.load %arg1[%c2_24] : memref<4xf32, #tpu.memory_space<smem>>
    %50 = vector.broadcast %49 : f32 to vector<1x128xf32>
    %51 = arith.select %46, %50, %39 : vector<1x128xi1>, vector<1x128xf32>
    %c3_25 = arith.constant 3 : index
    %c0_26 = arith.constant 0 : index
    %c0_27 = arith.constant 0 : index
    %52 = vector.load %arg2[%c3_25, %c0_26, %c0_27] : memref<4x1x128xf32, #tpu.memory_space<vmem>>, vector<1x1x128xf32>
    %53 = vector.shape_cast %52 : vector<1x1x128xf32> to vector<1x128xf32>
    %54 = arith.subf %53, %11 : vector<1x128xf32>
    %55 = math.exp %54 : vector<1x128xf32>
    %56 = arith.addf %44, %55 : vector<1x128xf32>
    %c3_i32 = arith.constant 3 : i32
    %57 = vector.broadcast %c3_i32 : i32 to vector<1x128xi32>
    %58 = arith.cmpi eq, %0, %57 : vector<1x128xi32>
    %59 = arith.select %58, %53, %47 : vector<1x128xi1>, vector<1x128xf32>
    %60 = arith.select %58, %55, %48 : vector<1x128xi1>, vector<1x128xf32>
    %c3_28 = arith.constant 3 : index
    %61 = memref.load %arg1[%c3_28] : memref<4xf32, #tpu.memory_space<smem>>
    %62 = vector.broadcast %61 : f32 to vector<1x128xf32>
    %63 = arith.select %58, %62, %51 : vector<1x128xi1>, vector<1x128xf32>
    %64 = math.log %56 : vector<1x128xf32>
    %65 = arith.subf %11, %59 : vector<1x128xf32>
    %66 = arith.addf %64, %65 : vector<1x128xf32>
    %67 = tpu.reciprocal %56 {approx = true} : vector<1x128xf32> -> vector<1x128xf32>
    %68 = arith.mulf %56, %67 : vector<1x128xf32>
    %cst_29 = arith.constant 2.000000e+00 : f32
    %69 = vector.broadcast %cst_29 : f32 to vector<1x128xf32>
    %70 = arith.subf %69, %68 : vector<1x128xf32>
    %71 = arith.mulf %67, %70 : vector<1x128xf32>
    %72 = arith.mulf %60, %71 : vector<1x128xf32>
    %cst_30 = arith.constant 9.99999993E-9 : f32
    %cst_31 = arith.constant 1.000000e+00 : f32
    %73 = vector.broadcast %cst_30 : f32 to vector<1x128xf32>
    %74 = arith.maximumf %73, %72 : vector<1x128xf32>
    %75 = vector.broadcast %cst_31 : f32 to vector<1x128xf32>
    %76 = arith.minimumf %75, %74 : vector<1x128xf32>
    %cst_32 = arith.constant 1.000000e+00 : f32
    %77 = vector.broadcast %cst_32 : f32 to vector<1x128xf32>
    %78 = arith.subf %77, %76 : vector<1x128xf32>
    %79 = arith.mulf %78, %78 : vector<1x128xf32>
    %80 = arith.mulf %63, %79 : vector<1x128xf32>
    %81 = arith.mulf %80, %66 : vector<1x128xf32>
    %c0_i32_33 = arith.constant 0 : i32
    %82 = arith.cmpi ne, %arg0, %c0_i32_33 : i32
    %83 = arith.extui %82 : i1 to i32
    %c0_i32_34 = arith.constant 0 : i32
    %84 = arith.cmpi ne, %83, %c0_i32_34 : i32
    scf.if %84 {
      %cst_37 = arith.constant dense<0.000000e+00> : vector<128xf32>
      %88 = vector.multi_reduction <add>, %81, %cst_37 [0] : vector<1x128xf32> to vector<128xf32>
      %89 = vector.shape_cast %88 : vector<128xf32> to vector<1x128xf32>
      %c0_38 = arith.constant 0 : index
      %c0_39 = arith.constant 0 : index
      %90 = vector.load %arg4[%c0_38, %c0_39] : memref<1x128xf32, #tpu.memory_space<vmem>>, vector<1x128xf32>
      tpu.vector_store %arg4[%c0_38, %c0_39], %89 {strides = array<i32>} : memref<1x128xf32, #tpu.memory_space<vmem>>, vector<1x128xf32>,
    } else {
    }
    %c0_i32_35 = arith.constant 0 : i32
    %85 = arith.cmpi eq, %arg0, %c0_i32_35 : i32
    %86 = arith.extui %85 : i1 to i32
    %c0_i32_36 = arith.constant 0 : i32
    %87 = arith.cmpi ne, %86, %c0_i32_36 : i32
    scf.if %87 {
      %88 = tpu.iota {dimensions = array<i32: 0>} : vector<1x128xi32>
      %89 = tpu.iota {dimensions = array<i32: 1>} : vector<1x128xi32>
      %c1_i32_37 = arith.constant 1 : i32
      %90 = arith.muli %arg0, %c1_i32_37 : i32
      %91 = vector.broadcast %90 : i32 to vector<1x128xi32>
      %92 = arith.addi %91, %88 : vector<1x128xi32>
      %c128_i32 = arith.constant 128 : i32
      %93 = vector.broadcast %c128_i32 : i32 to vector<1x128xi32>
      %94 = arith.muli %92, %93 : vector<1x128xi32>
      %95 = arith.addi %94, %89 : vector<1x128xi32>
      %c8_i32 = arith.constant 8 : i32
      %96 = vector.broadcast %c8_i32 : i32 to vector<1x128xi32>
      %97 = arith.cmpi slt, %95, %96 : vector<1x128xi32>
      %cst_38 = arith.constant 0.000000e+00 : f32
      %98 = vector.broadcast %cst_38 : f32 to vector<1x128xf32>
      %99 = arith.select %97, %81, %98 : vector<1x128xi1>, vector<1x128xf32>
      %cst_39 = arith.constant dense<0.000000e+00> : vector<128xf32>
      %100 = vector.multi_reduction <add>, %99, %cst_39 [0] : vector<1x128xf32> to vector<128xf32>
      %101 = vector.shape_cast %100 : vector<128xf32> to vector<1x128xf32>
      %c0_40 = arith.constant 0 : index
      %c0_41 = arith.constant 0 : index
      %102 = vector.load %arg4[%c0_40, %c0_41] : memref<1x128xf32, #tpu.memory_space<vmem>>, vector<1x128xf32>
      tpu.vector_store %arg4[%c0_40, %c0_41], %101 {strides = array<i32>} : memref<1x128xf32, #tpu.memory_space<vmem>>, vector<1x128xf32>,
    } else {
    }
    return
  }
  func.func @transform_0(%arg0: i32) -> i32 {
    %c0_i32 = arith.constant 0 : i32
    %c0_i32_0 = arith.constant 0 : i32
    return %c0_i32 : i32
  }
  func.func @transform_1(%arg0: i32) -> (i32, i32, i32) {
    %c0_i32 = arith.constant 0 : i32
    %c0_i32_0 = arith.constant 0 : i32
    %c0_i32_1 = arith.constant 0 : i32
    return %c0_i32, %arg0, %c0_i32_0 : i32, i32, i32
  }
  func.func @transform_2(%arg0: i32) -> (i32, i32) {
    %c0_i32 = arith.constant 0 : i32
    %c0_i32_0 = arith.constant 0 : i32
    return %arg0, %c0_i32 : i32, i32
  }
  func.func @transform_3(%arg0: i32) -> (i32, i32) {
    %c0_i32 = arith.constant 0 : i32
    %c0_i32_0 = arith.constant 0 : i32
    return %c0_i32, %arg0 : i32, i32
  }
}

</mosaic_0001>

<llo_original>
// kernel: tpu_custom_call.1
$region0: #{tpu_custom_call.1}
  #allocation0 [shape = 'u32[]', space=smem, size = 0x4, offset = 0x4, fixed_abs, tag = 'smem constant byte address 0x4 - core index']
  #allocation1 [shape = 'u32[72,128]{1,0:T(1,128)}', space=vmem, size = 0x9000, scoped, tag = 'internal scratch']
  %s0 = inlined_call_operand.hbm [shape: f32[4], index: 0, kind: input, shape index: {}]
  %s1 = inlined_call_operand.hbm [shape: f32[4,1,128], index: 1, kind: input, shape index: {}]
  %s2 = inlined_call_operand.vmem [shape: s32[1,128], index: 2, kind: input, shape index: {}]
  %s3 = inlined_call_operand.hbm [shape: f32[1,128], index: 3, kind: output, shape index: {}]
  %s4 = sld [smem:[#allocation0]]
  $region38: #{tpu_custom_call.1} parent=0
    _
  %s6 = ssub.s32 1, %s4
  %s7 = scalar_select 0, %s6, %s4
  $region1: #{tpu_custom_call.1} parent=0
    #allocation2 [shape = 'u8[512]{0}', space=smem, size = 0x200, scoped, tag = 'input window, operand 0, single buffered']
    #allocation3 [shape = 's32[1]{0}', space=sflag, size = 0x4, scoped, tag = 'scoped memory for tpu_custom_call.1']
    #allocation4 [shape = 's32[1]{0}', space=sflag, size = 0x4, scoped, tag = 'scoped memory for tpu_custom_call.1']
    #allocation5 [shape = 's32[1]{0}', space=sflag, size = 0x4, scoped, tag = 'scoped memory for tpu_custom_call.1']
    #allocation6 [shape = 'u8[2048]{0}', space=vmem, size = 0x800, scoped, tag = 'input window, operand 1, single buffered']
    #allocation7 [shape = 'u8[512]{0}', space=vmem, size = 0x400, scoped, tag = 'output window, operand 0, single buffered']
    %8 = vsyncpa [#allocation5], 0
    %9 = vsyncpa [#allocation3], 0
    %10 = vsyncpa [#allocation4], 0
    // Predicated region
    $region2: #{tpu_custom_call.1} parent=1 // pred_check
      _
    $region3: #{tpu_custom_call.1} parent=1 // pred_check_branch
      %12 = sbr.rel (0) target = $region5
    $region4: #{tpu_custom_call.1} parent=1 // pred_region
      %14 = vsyncadd [#allocation5], 0
      %s16 = sshll.u32 %s0, 4
      %s17 = int_to_ptr.hbm [resolvable:$true] %s16
      %19 = dma.hbm_to_smem %s17, 16, [#allocation2], [#allocation5]
    $region5: #{tpu_custom_call.1} parent=1 // pred_fallthru
      _
    // Predicated region
    $region6: #{tpu_custom_call.1} parent=1 // pred_check
      _
    $region7: #{tpu_custom_call.1} parent=1 // pred_check_branch
      %21 = sbr.rel (0) target = $region9
    $region8: #{tpu_custom_call.1} parent=1 // pred_region
      %23 = vsyncadd [#allocation3], 0
      %s24 = sshll.u32 %s1, 4
      %s25 = int_to_ptr.hbm [resolvable:$true] %s24
      %s26 = sshll.u32 [#allocation6], 4
      %s27 = int_to_ptr.vmem [resolvable:$true] %s26
      %32 = dma.hbm_to_vmem [thread:$0]  %s25, 64, %s27, [#allocation3], 16, 16, 1
    $region9: #{tpu_custom_call.1} parent=1 // pred_fallthru
      _
    // Predicated region
    $region10: #{tpu_custom_call.1} parent=1 // pred_check
      _
    $region11: #{tpu_custom_call.1} parent=1 // pred_check_branch
      %34 = sbr.rel (0) target = $region13
    $region12: #{tpu_custom_call.1} parent=1 // pred_region
      _
    $region13: #{tpu_custom_call.1} parent=1 // pred_fallthru
      _
    // Predicated region
    $region14: #{tpu_custom_call.1} parent=1 // pred_check
      _
    $region15: #{tpu_custom_call.1} parent=1 // pred_check_branch
      %36 = sbr.rel (0) target = $region17
    $region16: #{tpu_custom_call.1} parent=1 // pred_region
      %38 = dma.done [#allocation5], 16
    $region17: #{tpu_custom_call.1} parent=1 // pred_fallthru
      _
    // Predicated region
    $region18: #{tpu_custom_call.1} parent=1 // pred_check
      _
    $region19: #{tpu_custom_call.1} parent=1 // pred_check_branch
      %40 = sbr.rel (0) target = $region21
    $region20: #{tpu_custom_call.1} parent=1 // pred_region
      %42 = dma.done [#allocation3], 64
    $region21: #{tpu_custom_call.1} parent=1 // pred_fallthru
      _
    %43 = sfence
    %v44 = vld [vmem:[%s2] sm:$0x1]
    %v45 = vld [vmem:[#allocation6] sm:$0x1]
    %s46 = scalar_lea.vmem [#allocation6], 1
    %v47 = vld [vmem:[%s46] sm:$0x1]
    %v48 = vmax.f32 %v45, %v47
    %s49 = scalar_lea.vmem [#allocation6], 2
    %v50 = vld [vmem:[%s49] sm:$0x1]
    %v51 = vmax.f32 %v48, %v50
    %s52 = scalar_lea.vmem [#allocation6], 3
    %v53 = vld [vmem:[%s52] sm:$0x1]
    %v54 = vmax.f32 %v51, %v53
    %v55 = vsub.f32 %v45, %v54
    %v56 = vmul.f32 %v55, 1.442695
    %v57 = vpow.pop %v56
    %v58 = vadd.f32 %v57, 0.0
    %vm59 = vcmp.eq.s32.totalorder %v44, 0
    %v60 = vsel %vm59, %v45, 0.0
    %v61 = vsel %vm59, %v57, 0.0
    %s62 = sld [smem:[#allocation2]]
    %v63 = vstv %s62
    %v64 = vsel %vm59, %v63, 0.0
    %v65 = vsub.f32 %v47, %v54
    %v66 = vmul.f32 %v65, 1.442695
    %v67 = vpow.pop %v66
    %v68 = vadd.f32 %v58, %v67
    %vm69 = vcmp.eq.s32.totalorder %v44, 1
    %v70 = vsel %vm69, %v47, %v60
    %v71 = vsel %vm69, %v67, %v61
    %s72 = sld [smem:[#allocation2 + $0x1]]
    %v73 = vstv %s72
    %v74 = vsel %vm69, %v73, %v64
    %v75 = vsub.f32 %v50, %v54
    %v76 = vmul.f32 %v75, 1.442695
    %v77 = vpow.pop %v76
    %v78 = vadd.f32 %v68, %v77
    %vm79 = vcmp.eq.s32.totalorder %v44, 2
    %v80 = vsel %vm79, %v50, %v70
    %v81 = vsel %vm79, %v77, %v71
    %s82 = sld [smem:[#allocation2 + $0x2]]
    %v83 = vstv %s82
    %v84 = vsel %vm79, %v83, %v74
    %v85 = vsub.f32 %v53, %v54
    %v86 = vmul.f32 %v85, 1.442695
    %v87 = vpow.pop %v86
    %v88 = vadd.f32 %v78, %v87
    %vm89 = vcmp.eq.s32.totalorder %v44, 3
    %v90 = vsel %vm89, %v53, %v80
    %v91 = vsel %vm89, %v87, %v81
    %s92 = sld [smem:[#allocation2 + $0x3]]
    %v93 = vstv %s92
    %v94 = vsel %vm89, %v93, %v84
    %v95 = vlog2.pop %v88
    %v96 = vmul.f32 %v95, 0.6931472
    %v97 = vsub.f32 %v54, %v90
    %v98 = vadd.f32 %v96, %v97
    %v99 = vrcp.pop %v88
    %v100 = vmul.f32 %v88, %v99
    %v101 = vsub.f32 2.0, %v100
    %v102 = vmul.f32 %v99, %v101
    %v103 = vmul.f32 %v91, %v102
    %v104 = vmax.f32 %v103, 1e-08
    %v105 = vmin.f32 %v104, 1.0
    %v106 = vsub.f32 1.0, %v105
    %v107 = vmul.f32 %v106, %v106
    %v108 = vmul.f32 %v94, %v107
    %v109 = vmul.f32 %v108, %v98
    %p110 = scmp.ne.s32.totalorder 0, 0
    // Predicated region
    $region22: #{tpu_custom_call.1} parent=1 // pred_check
      %p111 = pneg %p110
    $region23: #{tpu_custom_call.1} parent=1 // pred_check_branch
      %113 = sbr.rel (%p111) target = $region25
    $region24: #{tpu_custom_call.1} parent=1 // pred_region
      %v114 = vadd.f32 %v109, 0.0
      %115 = vst [vmem:[#allocation7] sm:$0x1] %v114
    $region25: #{tpu_custom_call.1} parent=1 // pred_fallthru
      _
    %p116 = scmp.eq.s32.totalorder 0, 0
    // Predicated region
    $region26: #{tpu_custom_call.1} parent=1 // pred_check
      %p117 = pneg %p116
    $region27: #{tpu_custom_call.1} parent=1 // pred_check_branch
      %119 = sbr.rel (%p117) target = $region29
    $region28: #{tpu_custom_call.1} parent=1 // pred_region
      %v120 = vlaneseq
      %v121 = vshrl.u32 %v120, 7
      %v122 = vlaneseq
      %v123 = vand.u32 %v122, 127
      %v124 = vstv 0
      %v125 = vadd.s32 %v124, %v121
      %v126 = vmul.u32 %v125, 128
      %v127 = vadd.s32 %v126, %v123
      %vm128 = vcmp.lt.s32.totalorder %v127, 8
      %v129 = vsel %vm128, %v109, 0.0
      %v130 = vadd.f32 %v129, 0.0
      %131 = vst [vmem:[#allocation7] sm:$0x1] %v130
    $region29: #{tpu_custom_call.1} parent=1 // pred_fallthru
      _
    // Predicated region
    $region30: #{tpu_custom_call.1} parent=1 // pred_check
      _
    $region31: #{tpu_custom_call.1} parent=1 // pred_check_branch
      %133 = sbr.rel (0) target = $region33
    $region32: #{tpu_custom_call.1} parent=1 // pred_region
      %135 = vsyncadd [#allocation4], 0
      %s137 = sshll.u32 [#allocation7], 4
      %s138 = int_to_ptr.vmem [resolvable:$true] %s137
      %s139 = sshll.u32 %s3, 4
      %s140 = int_to_ptr.hbm [resolvable:$true] %s139
      %142 = dma.vmem_to_hbm [thread:$0]  %s138, 16, %s140, [#allocation4]
    $region33: #{tpu_custom_call.1} parent=1 // pred_fallthru
      _
    // Predicated region
    $region34: #{tpu_custom_call.1} parent=1 // pred_check
      _
    $region35: #{tpu_custom_call.1} parent=1 // pred_check_branch
      %144 = sbr.rel (0) target = $region37
    $region36: #{tpu_custom_call.1} parent=1 // pred_region
      %146 = dma.done [#allocation4], 16
    $region37: #{tpu_custom_call.1} parent=1 // pred_fallthru
      _
    %147 = vsyncpa [#allocation3], 1
    %148 = vsyncpa [#allocation4], 1
    %149 = vsyncpa [#allocation5], 1

</llo_original>
